<compile_context>
chip_gen: v7x
topology: tpu7x:2x2x1
jax: 0.10.0
libtpu: 0.0.40
codegen_flags: <defaults>
</compile_context>

<pallas_src>
import functools
import math

import numpy as np
import jax
import jax.numpy as jnp
from jax.experimental import pallas as pl
from jax.experimental.pallas import tpu as pltpu


def _hash_encode_kernel(x_ref, e_ref, o_ref, *, log2_T):
    """Fused hash-encode of a (TM, K*D) tile into a lane-dense (TM, K*L*D) tile."""
    x = x_ref[...]                                    # (TM, K*D) float32

    # Exact 3-way bf16 decomposition of x: hi + mid + lo == x (each subtraction is
    # exact in f32), so the bf16 MXU expansion below reproduces x * 2**l bit-exactly.
    x_hi = x.astype(jnp.bfloat16)
    r1 = x - x_hi.astype(jnp.float32)
    x_mid = r1.astype(jnp.bfloat16)
    x_lo = (r1 - x_mid.astype(jnp.float32)).astype(jnp.bfloat16)

    e = e_ref[...]                                    # (K*D, K*L*D) bf16, one-hot * 2**l
    scaled = (jnp.dot(x_hi, e, preferred_element_type=jnp.float32)
              + jnp.dot(x_mid, e, preferred_element_type=jnp.float32)
              + jnp.dot(x_lo, e, preferred_element_type=jnp.float32))

    # trunc-to-int (torch .int()) then floor-mod 2**log2_T (== bitwise AND for pow2).
    mask = jnp.int32(2 ** log2_T - 1)
    o_ref[...] = jnp.bitwise_and(scaled.astype(jnp.int32), mask).astype(jnp.float32)


def multi_resolution_hash_encoding(x, L, F, log2_T):
    """x: float array of shape (..., D). Returns (..., D*L) float32."""
    del F  # unused in the reference forward pass (kept for API parity)
    orig_shape = x.shape
    D = int(orig_shape[-1])
    x2 = x.reshape(-1, D).astype(jnp.float32)
    N = x2.shape[0]

    # Pack K coordinate rows per kernel row so the output lane width K*L*D is a
    # multiple of 128 (unmasked, lane-dense vector stores).
    K = 128 // math.gcd(L * D, 128)
    in_w = K * D
    out_w = K * L * D

    # Pad N up to a multiple of K, then pack rows (free row-major reshape).
    n_packed = -(-N // K)
    pad_rows = n_packed * K - N
    if pad_rows:
        x2 = jnp.pad(x2, ((0, pad_rows), (0, 0)))
    xp = x2.reshape(n_packed, in_w)

    # Row tile: as large as a ~24 MiB double-buffered VMEM budget allows (amortizes
    # the ~0.35 us per-grid-step overhead), capped for small inputs.
    vmem_budget = 24 * 1024 * 1024
    tm_cap = vmem_budget // (2 * 4 * (in_w + out_w))
    tm_cap = max(8, min(4096, (tm_cap // 8) * 8))
    tm = max(8, min(tm_cap, -(-n_packed // 8) * 8))

    pad_tiles = (-n_packed) % tm
    if pad_tiles:
        xp = jnp.pad(xp, ((0, pad_tiles), (0, 0)))
    n_rows = xp.shape[0]
    grid = n_rows // tm

    # Expansion matrix: E[k*D+d, (k*L+l)*D+d] = 2**l (powers of two are exact in bf16).
    e_np = np.zeros((in_w, out_w), dtype=np.float32)
    for k in range(K):
        for l in range(L):
            for d in range(D):
                e_np[k * D + d, (k * L + l) * D + d] = float(2 ** l)
    e = jnp.asarray(e_np, dtype=jnp.bfloat16)

    kernel = functools.partial(_hash_encode_kernel, log2_T=log2_T)

    cost = pl.CostEstimate(
        flops=int(3 * 2 * n_rows * in_w * out_w + 8 * n_rows * out_w),
        transcendentals=0,
        bytes_accessed=int(n_rows * (in_w + out_w) * 4 + e.size * 2),
    )

    out = pl.pallas_call(
        kernel,
        out_shape=jax.ShapeDtypeStruct((n_rows, out_w), jnp.float32),
        grid_spec=pltpu.PrefetchScalarGridSpec(
            num_scalar_prefetch=0,
            grid=(grid,),
            in_specs=[
                pl.BlockSpec((tm, in_w), lambda i: (i, 0)),
                pl.BlockSpec((in_w, out_w), lambda i: (0, 0)),
            ],
            out_specs=pl.BlockSpec((tm, out_w), lambda i: (i, 0)),
        ),
        compiler_params=pltpu.CompilerParams(
            dimension_semantics=("parallel",),
            vmem_limit_bytes=32 * 1024 * 1024,
        ),
        cost_estimate=cost,
    )(xp, e)

    # Unpack: (n_rows, K*L*D) -> (N, L*D) -> original leading dims (free reshapes
    # when no padding was needed).
    out = out[:n_packed].reshape(n_packed * K, L * D)[:N]
    return out.reshape(*orig_shape[:-1], D * L)


def _reference(x, L, log2_T):
    feats = []
    for l in range(L):
        h = (x * (2.0 ** l)).astype(jnp.int32)
        h = jnp.mod(h, 2 ** log2_T)
        feats.append(h.astype(jnp.float32))
    return jnp.concatenate(feats, axis=-1)


if __name__ == "__main__":
    # Module hyperparameters (deterministic, in-script).
    L, F, log2_T = 8, 2, 14

    # Small input: batch of 3-D coordinates (typical NeRF usage), incl. negatives.
    key = jax.random.PRNGKey(0)
    x = jax.random.uniform(key, (2, 128, 3), dtype=jnp.float32,
                           minval=-4.0, maxval=4.0)

    out = multi_resolution_hash_encoding(x, L, F, log2_T)
    out = jax.block_until_ready(out)

    ref = _reference(x, L, log2_T)
    assert out.shape == (2, 128, 3 * L), out.shape
    assert jnp.array_equal(out, ref), "mismatch vs reference"

    print("KERNEL_OK")
</pallas_src>

<mosaic_0001>
module attributes {stable_mosaic.version = 11 : i64} {
  func.func @_hash_encode_kernel(%arg0: i32, %arg1: memref<16x48xf32, #tpu.memory_space<vmem>>, %arg2: memref<48x384xbf16, #tpu.memory_space<vmem>>, %arg3: memref<16x384xf32, #tpu.memory_space<vmem>>) attributes {dimension_semantics = [#tpu.dimension_semantics<parallel>], iteration_bounds = array<i64: 1>, scalar_prefetch = 0 : i64, scratch_operands = 0 : i64, tpu.core_type = #tpu.core_type<tc>, window_params = [{transform_indices = @transform_0, window_bounds = array<i64: 16, 48>}, {pipeline_mode = #tpu.pipeline_mode<synchronous>, transform_indices = @transform_1, window_bounds = array<i64: 48, 384>}, {transform_indices = @transform_2, window_bounds = array<i64: 16, 384>}]} {
    %c0 = arith.constant 0 : index
    %c0_0 = arith.constant 0 : index
    %0 = vector.load %arg1[%c0, %c0_0] : memref<16x48xf32, #tpu.memory_space<vmem>>, vector<16x48xf32>
    %1 = arith.truncf %0 : vector<16x48xf32> to vector<16x48xbf16>
    %2 = arith.extf %1 : vector<16x48xbf16> to vector<16x48xf32>
    %3 = arith.subf %0, %2 : vector<16x48xf32>
    %4 = arith.truncf %3 : vector<16x48xf32> to vector<16x48xbf16>
    %5 = arith.extf %4 : vector<16x48xbf16> to vector<16x48xf32>
    %6 = arith.subf %3, %5 : vector<16x48xf32>
    %7 = arith.truncf %6 : vector<16x48xf32> to vector<16x48xbf16>
    %c0_1 = arith.constant 0 : index
    %c0_2 = arith.constant 0 : index
    %8 = vector.load %arg2[%c0_1, %c0_2] : memref<48x384xbf16, #tpu.memory_space<vmem>>, vector<48x384xbf16>
    %cst = arith.constant dense<0.000000e+00> : vector<16x384xf32>
    %9 = tpu.matmul %1, %8, %cst {dimension_numbers = #tpu.dot_dimension_numbers<[1], [0], [0], [1], [0, 0, 1, 1], [], []>} : vector<16x48xbf16>, vector<48x384xbf16>, vector<16x384xf32> -> vector<16x384xf32>
    %cst_3 = arith.constant dense<0.000000e+00> : vector<16x384xf32>
    %10 = tpu.matmul %4, %8, %cst_3 {dimension_numbers = #tpu.dot_dimension_numbers<[1], [0], [0], [1], [0, 0, 1, 1], [], []>} : vector<16x48xbf16>, vector<48x384xbf16>, vector<16x384xf32> -> vector<16x384xf32>
    %11 = arith.addf %9, %10 : vector<16x384xf32>
    %cst_4 = arith.constant dense<0.000000e+00> : vector<16x384xf32>
    %12 = tpu.matmul %7, %8, %cst_4 {dimension_numbers = #tpu.dot_dimension_numbers<[1], [0], [0], [1], [0, 0, 1, 1], [], []>} : vector<16x48xbf16>, vector<48x384xbf16>, vector<16x384xf32> -> vector<16x384xf32>
    %13 = arith.addf %11, %12 : vector<16x384xf32>
    %14 = arith.fptosi %13 : vector<16x384xf32> to vector<16x384xi32>
    %c16383_i32 = arith.constant 16383 : i32
    %15 = vector.broadcast %c16383_i32 : i32 to vector<16x384xi32>
    %16 = arith.andi %14, %15 : vector<16x384xi32>
    %17 = arith.sitofp %16 : vector<16x384xi32> to vector<16x384xf32>
    %c0_5 = arith.constant 0 : index
    %c0_6 = arith.constant 0 : index
    %18 = vector.load %arg3[%c0_5, %c0_6] : memref<16x384xf32, #tpu.memory_space<vmem>>, vector<16x384xf32>
    tpu.vector_store %arg3[%c0_5, %c0_6], %17 {strides = array<i32>} : memref<16x384xf32, #tpu.memory_space<vmem>>, vector<16x384xf32>,
    return
  }
  func.func @transform_0(%arg0: i32) -> (i32, i32) {
    %c0_i32 = arith.constant 0 : i32
    %c0_i32_0 = arith.constant 0 : i32
    return %arg0, %c0_i32 : i32, i32
  }
  func.func @transform_1(%arg0: i32) -> (i32, i32) {
    %c0_i32 = arith.constant 0 : i32
    %c0_i32_0 = arith.constant 0 : i32
    %c0_i32_1 = arith.constant 0 : i32
    return %c0_i32, %c0_i32_0 : i32, i32
  }
  func.func @transform_2(%arg0: i32) -> (i32, i32) {
    %c0_i32 = arith.constant 0 : i32
    %c0_i32_0 = arith.constant 0 : i32
    return %arg0, %c0_i32 : i32, i32
  }
}

</mosaic_0001>

<llo_original>
// kernel: tpu_custom_call.1
$region0: #{tpu_custom_call.1}
  #allocation0 [shape = 'u32[]', space=smem, size = 0x4, offset = 0x4, fixed_abs, tag = 'smem constant byte address 0x4 - core index']
  #allocation1 [shape = 'u32[144,128]{1,0:T(1,128)}', space=vmem, size = 0x12000, scoped, tag = 'internal scratch']
  %s0 = inlined_call_operand.hbm [shape: f32[16,48], index: 0, kind: input, shape index: {}]
  %s1 = inlined_call_operand.hbm [shape: bf16[48,384], index: 1, kind: input, shape index: {}]
  %s2 = inlined_call_operand.hbm [shape: f32[16,384], index: 2, kind: output, shape index: {}]
  %s3 = sld [smem:[#allocation0]]
  $region26: #{tpu_custom_call.1} parent=0
    _
  %s5 = ssub.s32 1, %s3
  %s6 = scalar_select 0, %s5, %s3
  $region1: #{tpu_custom_call.1} parent=0
    #allocation2 [shape = 'u8[8192]{0}', space=vmem, size = 0x2000, scoped, tag = 'input window, operand 0, single buffered']
    #allocation3 [shape = 's32[1]{0}', space=sflag, size = 0x4, scoped, tag = 'scoped memory for tpu_custom_call.1']
    #allocation4 [shape = 's32[1]{0}', space=sflag, size = 0x4, scoped, tag = 'scoped memory for tpu_custom_call.1']
    #allocation5 [shape = 'u8[36864]{0}', space=vmem, size = 0x9000, scoped, tag = 'input window, operand 1, single buffered']
    #allocation6 [shape = 's32[1]{0}', space=sflag, size = 0x4, scoped, tag = 'scoped memory for tpu_custom_call.1']
    #allocation7 [shape = 'u8[24576]{0}', space=vmem, size = 0x6000, scoped, tag = 'output window, operand 0, single buffered']
    %7 = vsyncpa [#allocation3], 0
    %8 = vsyncpa [#allocation6], 0
    %9 = vsyncpa [#allocation4], 0
    // Predicated region
    $region2: #{tpu_custom_call.1} parent=1 // pred_check
      _
    $region3: #{tpu_custom_call.1} parent=1 // pred_check_branch
      %11 = sbr.rel (0) target = $region5
    $region4: #{tpu_custom_call.1} parent=1 // pred_region
      %s13 = ssub.s32 256, 256
      %14 = vsyncadd [#allocation3], %s13
      %s15 = sshll.u32 [#allocation2], 4
      %s16 = int_to_ptr.vmem [resolvable:$true] %s15
      %21 = dma.hbm_to_vmem [thread:$0]  %s0, 256, %s16, [#allocation3], 128, 128, 8
    $region5: #{tpu_custom_call.1} parent=1 // pred_fallthru
      _
    // Predicated region
    $region6: #{tpu_custom_call.1} parent=1 // pred_check
      _
    $region7: #{tpu_custom_call.1} parent=1 // pred_check_branch
      %23 = sbr.rel (0) target = $region9
    $region8: #{tpu_custom_call.1} parent=1 // pred_region
      %s25 = ssub.s32 1152, 1152
      %26 = vsyncadd [#allocation6], %s25
      %s27 = sshll.u32 [#allocation5], 4
      %s28 = int_to_ptr.vmem [resolvable:$true] %s27
      %33 = dma.hbm_to_vmem [thread:$0]  %s1, 1152, %s28, [#allocation6], 192, 192, 12
    $region9: #{tpu_custom_call.1} parent=1 // pred_fallthru
      _
    // Predicated region
    $region10: #{tpu_custom_call.1} parent=1 // pred_check
      _
    $region11: #{tpu_custom_call.1} parent=1 // pred_check_branch
      %35 = sbr.rel (0) target = $region13
    $region12: #{tpu_custom_call.1} parent=1 // pred_region
      %36 = dma.done [#allocation3], 256
    $region13: #{tpu_custom_call.1} parent=1 // pred_fallthru
      _
    // Predicated region
    $region14: #{tpu_custom_call.1} parent=1 // pred_check
      _
    $region15: #{tpu_custom_call.1} parent=1 // pred_check_branch
      %38 = sbr.rel (0) target = $region17
    $region16: #{tpu_custom_call.1} parent=1 // pred_region
      %39 = dma.done [#allocation6], 1152
    $region17: #{tpu_custom_call.1} parent=1 // pred_fallthru
      _
    %v41 = vld [vmem:[#allocation2] sm:$0xff]
    %v42 = vld [vmem:[#allocation2 + $0x8] sm:$0xff]
    %v43 = vpack.c.bf16 %v42, %v41
    %v44 = vunpack.c.l.bf16 %v43
    %v45 = vunpack.c.h.bf16 %v43
    %v46 = vsub.f32 %v41, %v44
    %v47 = vsub.f32 %v42, %v45
    %v48 = vpack.c.bf16 %v47, %v46
    %v49 = vunpack.c.l.bf16 %v48
    %v50 = vunpack.c.h.bf16 %v48
    %v51 = vsub.f32 %v46, %v49
    %v52 = vsub.f32 %v47, %v50
    %v53 = vpack.c.bf16 %v52, %v51
    %v54 = vld [vmem:[#allocation5] sm:$0xff]
    %v55 = vld [vmem:[#allocation5 + $0x8] sm:$0xf]
    %v56 = vld [vmem:[#allocation5 + $0xc] sm:$0xff]
    %v57 = vld [vmem:[#allocation5 + $0x14] sm:$0xf]
    %v58 = vld [vmem:[#allocation5 + $0x18] sm:$0xff]
    %v59 = vld [vmem:[#allocation5 + $0x20] sm:$0xf]
    %v60 = vld [vmem:[#allocation5 + $0x24] sm:$0xff]
    %v61 = vld [vmem:[#allocation5 + $0x2c] sm:$0xf]
    %v62 = vld [vmem:[#allocation5 + $0x30] sm:$0xff]
    %v63 = vld [vmem:[#allocation5 + $0x38] sm:$0xf]
    %v64 = vld [vmem:[#allocation5 + $0x3c] sm:$0xff]
    %v65 = vld [vmem:[#allocation5 + $0x44] sm:$0xf]
    %v78 = vunpack.c.l.b16 %v54
    %v79 = vunpack.c.h.b16 %v54
    %v80 = vunpack.c.l.b16 %v55
    %v81 = vunpack.c.l.b16 %v56
    %v82 = vunpack.c.h.b16 %v56
    %v83 = vunpack.c.l.b16 %v57
    %v84 = vunpack.c.l.b16 %v58
    %v85 = vunpack.c.h.b16 %v58
    %v86 = vunpack.c.l.b16 %v59
    %v87 = vunpack.c.l.b16 %v60
    %v88 = vunpack.c.h.b16 %v60
    %v89 = vunpack.c.l.b16 %v61
    %v90 = vunpack.c.l.b16 %v62
    %v91 = vunpack.c.h.b16 %v62
    %v92 = vunpack.c.l.b16 %v63
    %v93 = vunpack.c.l.b16 %v64
    %v94 = vunpack.c.h.b16 %v64
    %v95 = vunpack.c.l.b16 %v65
    %v96 = vpack.c.b16 %v81, %v78
    %v97 = vpack.c.b16 %v82, %v79
    %v98 = vpack.c.b16 %v83, %v80
    %v99 = vpack.c.b16 %v87, %v84
    %v100 = vpack.c.b16 %v88, %v85
    %v101 = vpack.c.b16 %v89, %v86
    %v102 = vpack.c.b16 %v93, %v90
    %v103 = vpack.c.b16 %v94, %v91
    %v104 = vpack.c.b16 %v95, %v92
    %vm114 = vcmask 392192
    %v116 = vsel %vm114, %v48, 0
    %118 = vmatprep.subr.bf16.mxu0 %v97
    %119 = vmatpush1.bf16.msra.mxu0 %v96
    %120 = vmatprep.subr.bf16.mxu0 %v100
    %121 = vmatpush1.bf16.msra.mxu0 %v99
    %122 = vmatprep.subr.bf16.mxu0 %v103
    %123 = vmatpush1.bf16.msra.mxu0 %v102
    %124 = vmatprep.subr.bf16.mxu0 0
    %125 = vmatpush1.bf16.msra.mxu0 0
    %126 = vmatprep.subr.bf16.mxu0 0
    %127 = vmatpush1.bf16.msra.mxu0 0
    %128 = vmatprep.subr.bf16.mxu0 0
    %129 = vmatpush1.bf16.msra.mxu0 0
    %130 = vmatprep.subr.bf16.mxu0 0
    %131 = vmatpush1.bf16.msra.mxu0 0
    %132 = vmatprep.subr.bf16.mxu0 0
    %133 = vmatpush1.bf16.msra.mxu0 0
    %134 = vmatprep.subr.bf16.mxu0 0
    %135 = vmatpush1.bf16.msra.mxu0 0
    %136 = vmatprep.subr.bf16.mxu0 0
    %137 = vmatpush1.bf16.msra.mxu0 0
    %138 = vmatprep.subr.bf16.mxu0 0
    %139 = vmatpush1.bf16.msra.mxu0 0
    %140 = vmatprep.subr.bf16.mxu0 0
    %141 = vmatpush1.bf16.msra.mxu0 0
    %142 = vmatprep.subr.bf16.mxu0 0
    %143 = vmatpush1.bf16.msra.mxu0 0
    %144 = vmatprep.subr.bf16.mxu0 0
    %145 = vmatpush1.bf16.msra.mxu0 0
    %146 = vmatprep.subr.bf16.mxu0 0
    %147 = vmatpush1.bf16.msra.mxu0 0
    %148 = vmatprep.subr.bf16.mxu0 0
    %149 = vmatpush1.bf16.msra.mxu0 0
    %150 = vmatprep.mubr.bf16.mxu0 0
    %151 = vmatmul.mubr.bf16.gmra.mrb[0].mxu0 %v116
    %v152 = vpop.f32.mrb[0].mxu0
    %v153 = vadd.f32 0.0, %v152
    %v154 = vpop.f32.mrb[0].mxu0
    %v155 = vadd.f32 0.0, %v154
    %v156 = vpop.f32.mrb[0].mxu0
    %v157 = vadd.f32 0.0, %v156
    %v158 = vpop.f32.mrb[0].mxu0
    %v159 = vadd.f32 0.0, %v158
    %160 = vdwg.mxu0
    %161 = vmatprep.subr.bf16.mxu0 0
    %162 = vmatpush1.bf16.msra.mxu0 %v98
    %163 = vmatprep.subr.bf16.mxu0 0
    %164 = vmatpush1.bf16.msra.mxu0 %v101
    %165 = vmatprep.subr.bf16.mxu0 0
    %166 = vmatpush1.bf16.msra.mxu0 %v104
    %167 = vmatprep.subr.bf16.mxu0 0
    %168 = vmatpush1.bf16.msra.mxu0 0
    %169 = vmatprep.subr.bf16.mxu0 0
    %170 = vmatpush1.bf16.msra.mxu0 0
    %171 = vmatprep.subr.bf16.mxu0 0
    %172 = vmatpush1.bf16.msra.mxu0 0
    %173 = vmatprep.subr.bf16.mxu0 0
    %174 = vmatpush1.bf16.msra.mxu0 0
    %175 = vmatprep.subr.bf16.mxu0 0
    %176 = vmatpush1.bf16.msra.mxu0 0
    %177 = vmatprep.subr.bf16.mxu0 0
    %178 = vmatpush1.bf16.msra.mxu0 0
    %179 = vmatprep.subr.bf16.mxu0 0
    %180 = vmatpush1.bf16.msra.mxu0 0
    %181 = vmatprep.subr.bf16.mxu0 0
    %182 = vmatpush1.bf16.msra.mxu0 0
    %183 = vmatprep.subr.bf16.mxu0 0
    %184 = vmatpush1.bf16.msra.mxu0 0
    %185 = vmatprep.subr.bf16.mxu0 0
    %186 = vmatpush1.bf16.msra.mxu0 0
    %187 = vmatprep.subr.bf16.mxu0 0
    %188 = vmatpush1.bf16.msra.mxu0 0
    %189 = vmatprep.subr.bf16.mxu0 0
    %190 = vmatpush1.bf16.msra.mxu0 0
    %191 = vmatprep.subr.bf16.mxu0 0
    %192 = vmatpush1.bf16.msra.mxu0 0
    %193 = vmatprep.mubr.bf16.mxu0 0
    %194 = vmatmul.mubr.bf16.gmra.mrb[0].mxu0 %v116
    %v195 = vpop.f32.mrb[0].mxu0
    %v196 = vadd.f32 0.0, %v195
    %v197 = vpop.f32.mrb[0].mxu0
    %v198 = vpop.f32.mrb[0].mxu0
    %v199 = vadd.f32 0.0, %v198
    %v200 = vpop.f32.mrb[0].mxu0
    %201 = vdwg.mxu0
    %v203 = vsel %vm114, %v43, 0
    %205 = vmatprep.subr.bf16.mxu0 %v97
    %206 = vmatpush1.bf16.msra.mxu0 %v96
    %207 = vmatprep.subr.bf16.mxu0 %v100
    %208 = vmatpush1.bf16.msra.mxu0 %v99
    %209 = vmatprep.subr.bf16.mxu0 %v103
    %210 = vmatpush1.bf16.msra.mxu0 %v102
    %211 = vmatprep.subr.bf16.mxu0 0
    %212 = vmatpush1.bf16.msra.mxu0 0
    %213 = vmatprep.subr.bf16.mxu0 0
    %214 = vmatpush1.bf16.msra.mxu0 0
    %215 = vmatprep.subr.bf16.mxu0 0
    %216 = vmatpush1.bf16.msra.mxu0 0
    %217 = vmatprep.subr.bf16.mxu0 0
    %218 = vmatpush1.bf16.msra.mxu0 0
    %219 = vmatprep.subr.bf16.mxu0 0
    %220 = vmatpush1.bf16.msra.mxu0 0
    %221 = vmatprep.subr.bf16.mxu0 0
    %222 = vmatpush1.bf16.msra.mxu0 0
    %223 = vmatprep.subr.bf16.mxu0 0
    %224 = vmatpush1.bf16.msra.mxu0 0
    %225 = vmatprep.subr.bf16.mxu0 0
    %226 = vmatpush1.bf16.msra.mxu0 0
    %227 = vmatprep.subr.bf16.mxu0 0
    %228 = vmatpush1.bf16.msra.mxu0 0
    %229 = vmatprep.subr.bf16.mxu0 0
    %230 = vmatpush1.bf16.msra.mxu0 0
    %231 = vmatprep.subr.bf16.mxu0 0
    %232 = vmatpush1.bf16.msra.mxu0 0
    %233 = vmatprep.subr.bf16.mxu0 0
    %234 = vmatpush1.bf16.msra.mxu0 0
    %235 = vmatprep.subr.bf16.mxu0 0
    %236 = vmatpush1.bf16.msra.mxu0 0
    %237 = vmatprep.mubr.bf16.mxu0 0
    %238 = vmatmul.mubr.bf16.gmra.mrb[0].mxu0 %v203
    %v239 = vpop.f32.mrb[0].mxu0
    %v240 = vadd.f32 %v153, %v239
    %v241 = vpop.f32.mrb[0].mxu0
    %v242 = vadd.f32 %v155, %v241
    %v243 = vpop.f32.mrb[0].mxu0
    %v244 = vadd.f32 %v157, %v243
    %v245 = vpop.f32.mrb[0].mxu0
    %v246 = vadd.f32 %v159, %v245
    %247 = vdwg.mxu0
    %248 = vmatprep.subr.bf16.mxu0 0
    %249 = vmatpush1.bf16.msra.mxu0 %v98
    %250 = vmatprep.subr.bf16.mxu0 0
    %251 = vmatpush1.bf16.msra.mxu0 %v101
    %252 = vmatprep.subr.bf16.mxu0 0
    %253 = vmatpush1.bf16.msra.mxu0 %v104
    %254 = vmatprep.subr.bf16.mxu0 0
    %255 = vmatpush1.bf16.msra.mxu0 0
    %256 = vmatprep.subr.bf16.mxu0 0
    %257 = vmatpush1.bf16.msra.mxu0 0
    %258 = vmatprep.subr.bf16.mxu0 0
    %259 = vmatpush1.bf16.msra.mxu0 0
    %260 = vmatprep.subr.bf16.mxu0 0
    %261 = vmatpush1.bf16.msra.mxu0 0
    %262 = vmatprep.subr.bf16.mxu0 0
    %263 = vmatpush1.bf16.msra.mxu0 0
    %264 = vmatprep.subr.bf16.mxu0 0
    %265 = vmatpush1.bf16.msra.mxu0 0
    %266 = vmatprep.subr.bf16.mxu0 0
    %267 = vmatpush1.bf16.msra.mxu0 0
    %268 = vmatprep.subr.bf16.mxu0 0
    %269 = vmatpush1.bf16.msra.mxu0 0
    %270 = vmatprep.subr.bf16.mxu0 0
    %271 = vmatpush1.bf16.msra.mxu0 0
    %272 = vmatprep.subr.bf16.mxu0 0
    %273 = vmatpush1.bf16.msra.mxu0 0
    %274 = vmatprep.subr.bf16.mxu0 0
    %275 = vmatpush1.bf16.msra.mxu0 0
    %276 = vmatprep.subr.bf16.mxu0 0
    %277 = vmatpush1.bf16.msra.mxu0 0
    %278 = vmatprep.subr.bf16.mxu0 0
    %279 = vmatpush1.bf16.msra.mxu0 0
    %280 = vmatprep.mubr.bf16.mxu0 0
    %281 = vmatmul.mubr.bf16.gmra.mrb[0].mxu0 %v203
    %v282 = vpop.f32.mrb[0].mxu0
    %v283 = vadd.f32 %v196, %v282
    %v284 = vpop.f32.mrb[0].mxu0
    %v285 = vpop.f32.mrb[0].mxu0
    %v286 = vadd.f32 %v199, %v285
    %v287 = vpop.f32.mrb[0].mxu0
    %288 = vdwg.mxu0
    %v290 = vsel %vm114, %v53, 0
    %292 = vmatprep.subr.bf16.mxu0 %v97
    %293 = vmatpush1.bf16.msra.mxu0 %v96
    %294 = vmatprep.subr.bf16.mxu0 %v100
    %295 = vmatpush1.bf16.msra.mxu0 %v99
    %296 = vmatprep.subr.bf16.mxu0 %v103
    %297 = vmatpush1.bf16.msra.mxu0 %v102
    %298 = vmatprep.subr.bf16.mxu0 0
    %299 = vmatpush1.bf16.msra.mxu0 0
    %300 = vmatprep.subr.bf16.mxu0 0
    %301 = vmatpush1.bf16.msra.mxu0 0
    %302 = vmatprep.subr.bf16.mxu0 0
    %303 = vmatpush1.bf16.msra.mxu0 0
    %304 = vmatprep.subr.bf16.mxu0 0
    %305 = vmatpush1.bf16.msra.mxu0 0
    %306 = vmatprep.subr.bf16.mxu0 0
    %307 = vmatpush1.bf16.msra.mxu0 0
    %308 = vmatprep.subr.bf16.mxu0 0
    %309 = vmatpush1.bf16.msra.mxu0 0
    %310 = vmatprep.subr.bf16.mxu0 0
    %311 = vmatpush1.bf16.msra.mxu0 0
    %312 = vmatprep.subr.bf16.mxu0 0
    %313 = vmatpush1.bf16.msra.mxu0 0
    %314 = vmatprep.subr.bf16.mxu0 0
    %315 = vmatpush1.bf16.msra.mxu0 0
    %316 = vmatprep.subr.bf16.mxu0 0
    %317 = vmatpush1.bf16.msra.mxu0 0
    %318 = vmatprep.subr.bf16.mxu0 0
    %319 = vmatpush1.bf16.msra.mxu0 0
    %320 = vmatprep.subr.bf16.mxu0 0
    %321 = vmatpush1.bf16.msra.mxu0 0
    %322 = vmatprep.subr.bf16.mxu0 0
    %323 = vmatpush1.bf16.msra.mxu0 0
    %324 = vmatprep.mubr.bf16.mxu0 0
    %325 = vmatmul.mubr.bf16.gmra.mrb[0].mxu0 %v290
    %v326 = vpop.f32.mrb[0].mxu0
    %v327 = vadd.f32 0.0, %v326
    %v328 = vpop.f32.mrb[0].mxu0
    %v329 = vadd.f32 0.0, %v328
    %v330 = vpop.f32.mrb[0].mxu0
    %v331 = vadd.f32 0.0, %v330
    %v332 = vpop.f32.mrb[0].mxu0
    %v333 = vadd.f32 0.0, %v332
    %334 = vdwg.mxu0
    %335 = vmatprep.subr.bf16.mxu0 0
    %336 = vmatpush1.bf16.msra.mxu0 %v98
    %337 = vmatprep.subr.bf16.mxu0 0
    %338 = vmatpush1.bf16.msra.mxu0 %v101
    %339 = vmatprep.subr.bf16.mxu0 0
    %340 = vmatpush1.bf16.msra.mxu0 %v104
    %341 = vmatprep.subr.bf16.mxu0 0
    %342 = vmatpush1.bf16.msra.mxu0 0
    %343 = vmatprep.subr.bf16.mxu0 0
    %344 = vmatpush1.bf16.msra.mxu0 0
    %345 = vmatprep.subr.bf16.mxu0 0
    %346 = vmatpush1.bf16.msra.mxu0 0
    %347 = vmatprep.subr.bf16.mxu0 0
    %348 = vmatpush1.bf16.msra.mxu0 0
    %349 = vmatprep.subr.bf16.mxu0 0
    %350 = vmatpush1.bf16.msra.mxu0 0
    %351 = vmatprep.subr.bf16.mxu0 0
    %352 = vmatpush1.bf16.msra.mxu0 0
    %353 = vmatprep.subr.bf16.mxu0 0
    %354 = vmatpush1.bf16.msra.mxu0 0
    %355 = vmatprep.subr.bf16.mxu0 0
    %356 = vmatpush1.bf16.msra.mxu0 0
    %357 = vmatprep.subr.bf16.mxu0 0
    %358 = vmatpush1.bf16.msra.mxu0 0
    %359 = vmatprep.subr.bf16.mxu0 0
    %360 = vmatpush1.bf16.msra.mxu0 0
    %361 = vmatprep.subr.bf16.mxu0 0
    %362 = vmatpush1.bf16.msra.mxu0 0
    %363 = vmatprep.subr.bf16.mxu0 0
    %364 = vmatpush1.bf16.msra.mxu0 0
    %365 = vmatprep.subr.bf16.mxu0 0
    %366 = vmatpush1.bf16.msra.mxu0 0
    %367 = vmatprep.mubr.bf16.mxu0 0
    %368 = vmatmul.mubr.bf16.gmra.mrb[0].mxu0 %v290
    %v369 = vpop.f32.mrb[0].mxu0
    %v370 = vadd.f32 0.0, %v369
    %v371 = vpop.f32.mrb[0].mxu0
    %v372 = vpop.f32.mrb[0].mxu0
    %v373 = vadd.f32 0.0, %v372
    %v374 = vpop.f32.mrb[0].mxu0
    %375 = vdwg.mxu0
    %v376 = vadd.f32 %v240, %v327
    %v377 = vadd.f32 %v242, %v329
    %v378 = vadd.f32 %v283, %v370
    %v379 = vadd.f32 %v244, %v331
    %v380 = vadd.f32 %v246, %v333
    %v381 = vadd.f32 %v286, %v373
    %v382 = vcvt.f32.s32.to.zero.pseudo %v376
    %v383 = vcvt.f32.s32.to.zero.pseudo %v377
    %v384 = vcvt.f32.s32.to.zero.pseudo %v378
    %v385 = vcvt.f32.s32.to.zero.pseudo %v379
    %v386 = vcvt.f32.s32.to.zero.pseudo %v380
    %v387 = vcvt.f32.s32.to.zero.pseudo %v381
    %v388 = vand.u32 %v382, 16383
    %v389 = vand.u32 %v383, 16383
    %v390 = vand.u32 %v384, 16383
    %v391 = vand.u32 %v385, 16383
    %v392 = vand.u32 %v386, 16383
    %v393 = vand.u32 %v387, 16383
    %v394 = vcvt.s32.f32 %v388
    %v395 = vcvt.s32.f32 %v389
    %v396 = vcvt.s32.f32 %v390
    %v397 = vcvt.s32.f32 %v391
    %v398 = vcvt.s32.f32 %v392
    %v399 = vcvt.s32.f32 %v393
    %400 = vst [vmem:[#allocation7] sm:$0xff] %v394
    %401 = vst [vmem:[#allocation7 + $0x8] sm:$0xff] %v395
    %402 = vst [vmem:[#allocation7 + $0x10] sm:$0xff] %v396
    %403 = vst [vmem:[#allocation7 + $0x18] sm:$0xff] %v397
    %404 = vst [vmem:[#allocation7 + $0x20] sm:$0xff] %v398
    %405 = vst [vmem:[#allocation7 + $0x28] sm:$0xff] %v399
    // Predicated region
    $region18: #{tpu_custom_call.1} parent=1 // pred_check
      _
    $region19: #{tpu_custom_call.1} parent=1 // pred_check_branch
      %407 = sbr.rel (0) target = $region21
    $region20: #{tpu_custom_call.1} parent=1 // pred_region
      %s409 = ssub.s32 768, 768
      %410 = vsyncadd [#allocation4], %s409
      %s411 = sshll.u32 [#allocation7], 4
      %s412 = int_to_ptr.vmem [resolvable:$true] %s411
      %417 = dma.vmem_to_hbm [thread:$0]  %s412, 768, %s2, [#allocation4], 384, 384, 24
    $region21: #{tpu_custom_call.1} parent=1 // pred_fallthru
      _
    // Predicated region
    $region22: #{tpu_custom_call.1} parent=1 // pred_check
      _
    $region23: #{tpu_custom_call.1} parent=1 // pred_check_branch
      %419 = sbr.rel (0) target = $region25
    $region24: #{tpu_custom_call.1} parent=1 // pred_region
      %420 = dma.done [#allocation4], 768
    $region25: #{tpu_custom_call.1} parent=1 // pred_fallthru
      _
    %421 = vsyncpa [#allocation3], 1
    %422 = vsyncpa [#allocation6], 1
    %423 = vsyncpa [#allocation4], 1

</llo_original>
